<compile_context>
chip_gen: v5e
topology: v5e:2x2
jax: 0.10.0
libtpu: 0.0.40
codegen_flags: <defaults>
</compile_context>

<pallas_src>
import functools

import jax
import jax.numpy as jnp
from jax.experimental import pallas as pl
from jax.experimental.pallas import tpu as pltpu


NEG_SLOPE = 0.2
HIDDEN = 256
K_RESIDENT_MAX = 4096     # keep W1 fully resident in VMEM up to this input size
K_TILE = 2048             # layer-1 K tile when streaming W1


def _round_up(x, m):
    return ((x + m - 1) // m) * m


def _leaky_relu(x):
    return jnp.where(x >= 0, x, NEG_SLOPE * x)


def _tpu_kind():
    try:
        return jax.devices()[0].device_kind.lower()
    except Exception:
        return ""


def _is_256_mxu(kind):
    return ("v6" in kind) or ("v7" in kind) or ("7x" in kind)


def _is_multi_tensorcore(kind):
    # v7x has 2 TCs per chip; v4 / v5p are megacore (2 TCs per Pallas device).
    if ("v7" in kind) or ("7x" in kind) or ("v4" in kind):
        return True
    return ("v5" in kind) and ("lite" not in kind) and ("v5e" not in kind)


def _vmem_limit_bytes(kind):
    if ("v7" in kind) or ("7x" in kind):
        return 56 * 1024 * 1024      # 64 MiB physical per TensorCore
    if any(t in kind for t in ("v4", "v5", "v6")):
        return 96 * 1024 * 1024      # 128 MiB physical
    return 48 * 1024 * 1024          # conservative default for unknown chips


def _choose_tb(b_rows, kind):
    """Batch tile: multiple of 8, <= b_rows, capped at the MXU M width; split
    into >=2 tiles only on chips where the 'parallel' axis shards across TCs."""
    cap = 256 if _is_256_mxu(kind) else 128
    tb = min(cap, (b_rows // 8) * 8)
    if _is_multi_tensorcore(kind) and b_rows > 16:
        tb = min(tb, _round_up((b_rows + 1) // 2, 8))
    return max(tb, 8)


def _mlp_kernel(x_ref, w1_ref, b1_ref, w2_ref, b2_ref, w3_ref, b3_ref,
                o_ref, acc_ref, *, k_rem):
    """Fused 3-layer MLP for one TB-row batch tile; layer 1 K-tiled on axis 1."""
    k = pl.program_id(1)
    nk = pl.num_programs(1)

    @pl.when(k == 0)
    def _():
        acc_ref[...] = jnp.zeros_like(acc_ref)

    x = x_ref[...]
    if k_rem:
        # Last K block is partial: zero the stale columns so they do not
        # contribute to the layer-1 accumulation (W1 pad rows are already 0).
        col = jax.lax.broadcasted_iota(jnp.int32, x.shape, 1)
        limit = jnp.where(k == nk - 1, k_rem, x.shape[1])
        x = jnp.where(col < limit, x, 0)

    # Layer 1 (partial K): bf16 operands on the MXU, f32 accumulation.
    acc_ref[...] += jnp.dot(x.astype(jnp.bfloat16), w1_ref[...],
                            preferred_element_type=jnp.float32)

    @pl.when(k == nk - 1)
    def _():
        h1 = _leaky_relu(acc_ref[...] + b1_ref[...])
        # Layer 2: feed bf16 to the MXU, element-wise math in f32.
        h2 = jnp.dot(h1.astype(jnp.bfloat16), w2_ref[...],
                     preferred_element_type=jnp.float32)
        h2 = _leaky_relu(h2 + b2_ref[...])
        # Layer 3: contract the hidden axis of both operands (w3 @ h2^T) so the
        # result lands with batch on the lane axis -> lane-dense output store.
        logits = jax.lax.dot_general(
            w3_ref[...], h2.astype(jnp.bfloat16),
            dimension_numbers=(((1,), (1,)), ((), ())),
            preferred_element_type=jnp.float32)             # (16, TB) identical rows
        out = jax.nn.sigmoid(logits[0:1, :] + b3_ref[0])    # (1, TB) f32
        o_ref[...] = out[None].astype(o_ref.dtype)          # (1, 1, TB)


def prepare_params(w1, b1, w2, b2, w3, b3):
    """One-time conversion of [in, out]-layout params into kernel-ready arrays.

    Call ONCE outside the per-step jit: the forward pass then streams bf16
    weights straight from HBM with no per-call conversion pass.
    """
    d = w1.shape[0]
    w1b = jnp.asarray(w1, jnp.bfloat16)
    if d > K_RESIDENT_MAX:
        d_pad = _round_up(d, K_TILE)
        if d_pad != d:                      # zero rows -> padded K blocks are inert
            w1b = jnp.pad(w1b, ((0, d_pad - d), (0, 0)))
    b1r = jnp.asarray(b1, jnp.float32).reshape(1, HIDDEN)
    w2b = jnp.asarray(w2, jnp.bfloat16)
    b2r = jnp.asarray(b2, jnp.float32).reshape(1, HIDDEN)
    # w3 replicated over 16 sublane rows (bf16-native tile); kernel uses row 0.
    w3r = jnp.tile(jnp.asarray(w3, jnp.bfloat16).reshape(1, HIDDEN), (16, 1))
    b3s = jnp.asarray(b3, jnp.float32).reshape(1)
    return w1b, b1r, w2b, b2r, w3r, b3s


@jax.jit
def discreminator_forward(x, w1, b1, w2, b2, w3, b3):
    """x: [B, ...] flattened to [B, input_size]; weights ideally from prepare_params."""
    B = x.shape[0]
    x2d = x.reshape(B, -1)
    D = x2d.shape[1]

    # Defensive normalization (all no-ops when prepare_params was used).
    if w1.dtype != jnp.bfloat16:
        w1 = w1.astype(jnp.bfloat16)
    if w2.dtype != jnp.bfloat16:
        w2 = w2.astype(jnp.bfloat16)
    b1 = b1.reshape(1, HIDDEN).astype(jnp.float32)
    b2 = b2.reshape(1, HIDDEN).astype(jnp.float32)
    if w3.shape != (16, HIDDEN):
        w3 = jnp.tile(w3.reshape(1, HIDDEN).astype(jnp.bfloat16), (16, 1))
    elif w3.dtype != jnp.bfloat16:
        w3 = w3.astype(jnp.bfloat16)
    b3 = b3.reshape(1).astype(jnp.float32)

    d_pad = w1.shape[0]

    # Layer-1 K tiling decision (matches prepare_params).
    if d_pad > K_RESIDENT_MAX:
        tk = K_TILE
        if d_pad % tk != 0:                 # prepare_params not used: pad here
            d_new = _round_up(d_pad, tk)
            w1 = jnp.pad(w1, ((0, d_new - d_pad), (0, 0)))
            d_pad = d_new
        if d_pad != _round_up(D, tk):
            raise ValueError(f"w1 rows ({w1.shape[0]}) do not match input size {D}")
        num_k = d_pad // tk
        k_rem = D % tk
    else:
        if d_pad != D:
            raise ValueError(f"w1 rows ({d_pad}) do not match input size {D}")
        tk = d_pad
        num_k = 1
        k_rem = 0

    kind = _tpu_kind()

    if B < 8:
        # Tiny batches: pad to a single 8-row tile (negligible copy).
        x2d = jnp.pad(x2d, ((0, 8 - B), (0, 0)))
        b_rows = 8
    else:
        b_rows = B                          # trailing partial tile handled by Pallas
    tb = _choose_tb(b_rows, kind)
    num_b = (b_rows + tb - 1) // tb

    flops = 2 * b_rows * (D * HIDDEN + HIDDEN * HIDDEN + HIDDEN)
    bytes_accessed = (x2d.size * x2d.dtype.itemsize
                      + w1.size * w1.dtype.itemsize
                      + w2.size * w2.dtype.itemsize
                      + w3.size * w3.dtype.itemsize
                      + (b1.size + b2.size + b3.size) * 4
                      + num_b * tb * 4)

    out = pl.pallas_call(
        functools.partial(_mlp_kernel, k_rem=k_rem),
        out_shape=jax.ShapeDtypeStruct((num_b, 1, tb), jnp.float32),
        grid_spec=pltpu.PrefetchScalarGridSpec(
            num_scalar_prefetch=0,
            grid=(num_b, num_k),
            in_specs=[
                pl.BlockSpec((tb, tk), lambda i, k: (i, k)),           # x tile (f32)
                pl.BlockSpec((tk, HIDDEN), lambda i, k: (k, 0)),       # W1 (bf16)
                pl.BlockSpec((1, HIDDEN), lambda i, k: (0, 0)),        # b1 (f32)
                pl.BlockSpec((HIDDEN, HIDDEN), lambda i, k: (0, 0)),   # W2 (bf16)
                pl.BlockSpec((1, HIDDEN), lambda i, k: (0, 0)),        # b2 (f32)
                pl.BlockSpec((16, HIDDEN), lambda i, k: (0, 0)),       # W3 rows (bf16)
                pl.BlockSpec(memory_space=pltpu.MemorySpace.SMEM),     # b3 scalar
            ],
            out_specs=pl.BlockSpec((1, 1, tb), lambda i, k: (i, 0, 0)),
            scratch_shapes=[pltpu.VMEM((tb, HIDDEN), jnp.float32)],    # layer-1 acc
        ),
        compiler_params=pltpu.CompilerParams(
            dimension_semantics=("parallel", "arbitrary"),
            vmem_limit_bytes=_vmem_limit_bytes(kind),
        ),
        cost_estimate=pl.CostEstimate(
            flops=flops, transcendentals=b_rows, bytes_accessed=bytes_accessed),
    )(x2d, w1, b1, w2, b2, w3, b3)

    # (num_b, 1, tb) is row-major == batch order; drop padded / garbage rows.
    return out.reshape(num_b * tb, 1)[:B]


def init_params(key, input_size):
    """Deterministic init mimicking PyTorch nn.Linear default U[-1/sqrt(fan_in), +]."""
    def linear(k, fan_in, fan_out):
        kw, kb = jax.random.split(k)
        bound = 1.0 / jnp.sqrt(float(fan_in))
        w = jax.random.uniform(kw, (fan_in, fan_out), jnp.float32, -bound, bound)
        b = jax.random.uniform(kb, (fan_out,), jnp.float32, -bound, bound)
        return w, b

    k1, k2, k3 = jax.random.split(key, 3)
    w1, b1 = linear(k1, input_size, HIDDEN)
    w2, b2 = linear(k2, HIDDEN, HIDDEN)
    w3, b3 = linear(k3, HIDDEN, 1)
    return w1, b1, w2, b2, w3, b3


def _reference(x, w1, b1, w2, b2, w3, b3):
    x2d = x.reshape(x.shape[0], -1).astype(jnp.float32)
    h1 = _leaky_relu(x2d @ w1 + b1.reshape(1, -1))
    h2 = _leaky_relu(h1 @ w2 + b2.reshape(1, -1))
    return jax.nn.sigmoid(h2 @ w3 + b3.reshape(1, -1))


if __name__ == "__main__":
    key = jax.random.PRNGKey(0)
    kx, kp, kx2, kp2, kx3 = jax.random.split(key, 5)

    # Small NCHW input, as a GAN discriminator would flatten: [2, 4, 16, 16]
    B, C, H, W = 2, 4, 16, 16
    input_size = C * H * W
    x = jax.random.normal(kx, (B, C, H, W), dtype=jnp.float32)
    raw = init_params(kp, input_size)
    params = prepare_params(*raw)            # one-time bf16 conversion

    out = jax.block_until_ready(discreminator_forward(x, *params))
    ref = _reference(x, *raw)
    assert out.shape == (B, 1)
    # bf16 weight/activation streaming -> small deviation vs the f32 reference.
    assert jnp.allclose(out, ref, atol=2e-2, rtol=0), float(jnp.max(jnp.abs(out - ref)))

    # Multi-row batch, not tile aligned: exercises partial trailing batch block
    # (no wrapper-side pad pass) and the multi-TC split on v7x.
    B2 = 40
    x2 = jax.random.normal(kx2, (B2, C, H, W), dtype=jnp.float32)
    out2 = jax.block_until_ready(discreminator_forward(x2, *params))
    ref2 = _reference(x2, *raw)
    assert out2.shape == (B2, 1)
    assert jnp.allclose(out2, ref2, atol=2e-2, rtol=0), float(jnp.max(jnp.abs(out2 - ref2)))

    # Large input_size: exercises the K-tiled layer-1 path (streamed W1 blocks,
    # f32 accumulator, masked partial K block).
    B3, D3 = 16, 5000
    raw3 = init_params(kp2, D3)
    params3 = prepare_params(*raw3)
    x3 = jax.random.normal(kx3, (B3, D3), dtype=jnp.float32)
    out3 = jax.block_until_ready(discreminator_forward(x3, *params3))
    ref3 = _reference(x3, *raw3)
    assert out3.shape == (B3, 1)
    assert jnp.allclose(out3, ref3, atol=3e-2, rtol=0), float(jnp.max(jnp.abs(out3 - ref3)))

    print("KERNEL_OK")
</pallas_src>

<mosaic_0001>
module attributes {stable_mosaic.version = 11 : i64} {
  func.func @_mlp_kernel(%arg0: i32, %arg1: i32, %arg2: memref<8x1024xf32, #tpu.memory_space<vmem>>, %arg3: memref<1024x256xbf16, #tpu.memory_space<vmem>>, %arg4: memref<1x256xf32, #tpu.memory_space<vmem>>, %arg5: memref<256x256xbf16, #tpu.memory_space<vmem>>, %arg6: memref<1x256xf32, #tpu.memory_space<vmem>>, %arg7: memref<16x256xbf16, #tpu.memory_space<vmem>>, %arg8: memref<1xf32, #tpu.memory_space<smem>>, %arg9: memref<1x1x8xf32, #tpu.memory_space<vmem>>, %arg10: memref<8x256xf32, #tpu.memory_space<vmem>>) attributes {dimension_semantics = [#tpu.dimension_semantics<parallel>, #tpu.dimension_semantics<arbitrary>], iteration_bounds = array<i64: 1, 1>, scalar_prefetch = 0 : i64, scratch_operands = 1 : i64, tpu.core_type = #tpu.core_type<tc>, window_params = [{transform_indices = @transform_0, window_bounds = array<i64: 8, 1024>}, {transform_indices = @transform_1, window_bounds = array<i64: 1024, 256>}, {pipeline_mode = #tpu.pipeline_mode<synchronous>, transform_indices = @transform_2, window_bounds = array<i64: 1, 256>}, {pipeline_mode = #tpu.pipeline_mode<synchronous>, transform_indices = @transform_3, window_bounds = array<i64: 256, 256>}, {pipeline_mode = #tpu.pipeline_mode<synchronous>, transform_indices = @transform_4, window_bounds = array<i64: 1, 256>}, {pipeline_mode = #tpu.pipeline_mode<synchronous>, transform_indices = @transform_5, window_bounds = array<i64: 16, 256>}, {transform_indices = @transform_6, window_bounds = array<i64: 1>}, {transform_indices = @transform_7, window_bounds = array<i64: 1, 1, 8>}]} {
    %c0_i32 = arith.constant 0 : i32
    %0 = arith.cmpi eq, %arg1, %c0_i32 : i32
    %1 = arith.extui %0 : i1 to i32
    %c0_i32_0 = arith.constant 0 : i32
    %2 = arith.cmpi ne, %1, %c0_i32_0 : i32
    scf.if %2 {
      %cst_10 = arith.constant 0.000000e+00 : f32
      %13 = vector.broadcast %cst_10 : f32 to vector<8x256xf32>
      %c0_11 = arith.constant 0 : index
      %c0_12 = arith.constant 0 : index
      %14 = vector.load %arg10[%c0_11, %c0_12] : memref<8x256xf32, #tpu.memory_space<vmem>>, vector<8x256xf32>
      tpu.vector_store %arg10[%c0_11, %c0_12], %13 {strides = array<i32>} : memref<8x256xf32, #tpu.memory_space<vmem>>, vector<8x256xf32>,
    } else {
    }
    %c0 = arith.constant 0 : index
    %c0_1 = arith.constant 0 : index
    %3 = vector.load %arg2[%c0, %c0_1] : memref<8x1024xf32, #tpu.memory_space<vmem>>, vector<8x1024xf32>
    %c0_2 = arith.constant 0 : index
    %c0_3 = arith.constant 0 : index
    %4 = vector.load %arg10[%c0_2, %c0_3] : memref<8x256xf32, #tpu.memory_space<vmem>>, vector<8x256xf32>
    %5 = arith.truncf %3 : vector<8x1024xf32> to vector<8x1024xbf16>
    %c0_4 = arith.constant 0 : index
    %c0_5 = arith.constant 0 : index
    %6 = vector.load %arg3[%c0_4, %c0_5] : memref<1024x256xbf16, #tpu.memory_space<vmem>>, vector<1024x256xbf16>
    %cst = arith.constant dense<0.000000e+00> : vector<8x256xf32>
    %7 = tpu.matmul %5, %6, %cst {dimension_numbers = #tpu.dot_dimension_numbers<[1], [0], [0], [1], [0, 0, 1, 1], [], []>} : vector<8x1024xbf16>, vector<1024x256xbf16>, vector<8x256xf32> -> vector<8x256xf32>
    %8 = arith.addf %4, %7 : vector<8x256xf32>
    %c0_6 = arith.constant 0 : index
    %c0_7 = arith.constant 0 : index
    %9 = vector.load %arg10[%c0_6, %c0_7] : memref<8x256xf32, #tpu.memory_space<vmem>>, vector<8x256xf32>
    tpu.vector_store %arg10[%c0_6, %c0_7], %8 {strides = array<i32>} : memref<8x256xf32, #tpu.memory_space<vmem>>, vector<8x256xf32>,
    %c0_i32_8 = arith.constant 0 : i32
    %10 = arith.cmpi eq, %arg1, %c0_i32_8 : i32
    %11 = arith.extui %10 : i1 to i32
    %c0_i32_9 = arith.constant 0 : i32
    %12 = arith.cmpi ne, %11, %c0_i32_9 : i32
    scf.if %12 {
      %c0_10 = arith.constant 0 : index
      %c0_11 = arith.constant 0 : index
      %13 = vector.load %arg10[%c0_10, %c0_11] : memref<8x256xf32, #tpu.memory_space<vmem>>, vector<8x256xf32>
      %c0_12 = arith.constant 0 : index
      %c0_13 = arith.constant 0 : index
      %14 = vector.load %arg4[%c0_12, %c0_13] : memref<1x256xf32, #tpu.memory_space<vmem>>, vector<1x256xf32>
      %15 = vector.broadcast %14 : vector<1x256xf32> to vector<8x256xf32>
      %16 = arith.addf %13, %15 : vector<8x256xf32>
      %cst_14 = arith.constant 0.000000e+00 : f32
      %17 = vector.broadcast %cst_14 : f32 to vector<8x256xf32>
      %18 = arith.cmpf oge, %16, %17 : vector<8x256xf32>
      %cst_15 = arith.constant 2.000000e-01 : f32
      %19 = vector.broadcast %cst_15 : f32 to vector<8x256xf32>
      %20 = arith.mulf %19, %16 : vector<8x256xf32>
      %21 = arith.select %18, %16, %20 : vector<8x256xi1>, vector<8x256xf32>
      %22 = arith.truncf %21 : vector<8x256xf32> to vector<8x256xbf16>
      %c0_16 = arith.constant 0 : index
      %c0_17 = arith.constant 0 : index
      %23 = vector.load %arg5[%c0_16, %c0_17] : memref<256x256xbf16, #tpu.memory_space<vmem>>, vector<256x256xbf16>
      %cst_18 = arith.constant dense<0.000000e+00> : vector<8x256xf32>
      %24 = tpu.matmul %22, %23, %cst_18 {dimension_numbers = #tpu.dot_dimension_numbers<[1], [0], [0], [1], [0, 0, 1, 1], [], []>} : vector<8x256xbf16>, vector<256x256xbf16>, vector<8x256xf32> -> vector<8x256xf32>
      %c0_19 = arith.constant 0 : index
      %c0_20 = arith.constant 0 : index
      %25 = vector.load %arg6[%c0_19, %c0_20] : memref<1x256xf32, #tpu.memory_space<vmem>>, vector<1x256xf32>
      %26 = vector.broadcast %25 : vector<1x256xf32> to vector<8x256xf32>
      %27 = arith.addf %24, %26 : vector<8x256xf32>
      %cst_21 = arith.constant 0.000000e+00 : f32
      %28 = vector.broadcast %cst_21 : f32 to vector<8x256xf32>
      %29 = arith.cmpf oge, %27, %28 : vector<8x256xf32>
      %cst_22 = arith.constant 2.000000e-01 : f32
      %30 = vector.broadcast %cst_22 : f32 to vector<8x256xf32>
      %31 = arith.mulf %30, %27 : vector<8x256xf32>
      %32 = arith.select %29, %27, %31 : vector<8x256xi1>, vector<8x256xf32>
      %c0_23 = arith.constant 0 : index
      %c0_24 = arith.constant 0 : index
      %33 = vector.load %arg7[%c0_23, %c0_24] : memref<16x256xbf16, #tpu.memory_space<vmem>>, vector<16x256xbf16>
      %34 = arith.truncf %32 : vector<8x256xf32> to vector<8x256xbf16>
      %cst_25 = arith.constant dense<0.000000e+00> : vector<16x8xf32>
      %35 = tpu.matmul %33, %34, %cst_25 {dimension_numbers = #tpu.dot_dimension_numbers<[1], [1], [0], [0], [0, 0, 1, 0], [], []>} : vector<16x256xbf16>, vector<8x256xbf16>, vector<16x8xf32> -> vector<16x8xf32>
      %36 = vector.extract_strided_slice %35 {offsets = [0, 0], sizes = [1, 8], strides = [1, 1]} : vector<16x8xf32> to vector<1x8xf32>
      %c0_26 = arith.constant 0 : index
      %37 = memref.load %arg8[%c0_26] : memref<1xf32, #tpu.memory_space<smem>>
      %38 = vector.broadcast %37 : f32 to vector<1x8xf32>
      %39 = arith.addf %36, %38 : vector<1x8xf32>
      %40 = arith.negf %39 : vector<1x8xf32>
      %41 = math.exp %40 : vector<1x8xf32>
      %cst_27 = arith.constant 1.000000e+00 : f32
      %42 = vector.broadcast %cst_27 : f32 to vector<1x8xf32>
      %43 = arith.addf %42, %41 : vector<1x8xf32>
      %44 = arith.divf %42, %43 : vector<1x8xf32>
      %45 = vector.shape_cast %44 : vector<1x8xf32> to vector<1x1x8xf32>
      %c0_28 = arith.constant 0 : index
      %c0_29 = arith.constant 0 : index
      %c0_30 = arith.constant 0 : index
      %46 = vector.load %arg9[%c0_28, %c0_29, %c0_30] : memref<1x1x8xf32, #tpu.memory_space<vmem>>, vector<1x1x8xf32>
      tpu.vector_store %arg9[%c0_28, %c0_29, %c0_30], %45 {strides = array<i32>} : memref<1x1x8xf32, #tpu.memory_space<vmem>>, vector<1x1x8xf32>,
    } else {
    }
    return
  }
  func.func @transform_0(%arg0: i32, %arg1: i32) -> (i32, i32) {
    %c0_i32 = arith.constant 0 : i32
    return %arg0, %arg1 : i32, i32
  }
  func.func @transform_1(%arg0: i32, %arg1: i32) -> (i32, i32) {
    %c0_i32 = arith.constant 0 : i32
    %c0_i32_0 = arith.constant 0 : i32
    return %arg1, %c0_i32 : i32, i32
  }
  func.func @transform_2(%arg0: i32, %arg1: i32) -> (i32, i32) {
    %c0_i32 = arith.constant 0 : i32
    %c0_i32_0 = arith.constant 0 : i32
    %c0_i32_1 = arith.constant 0 : i32
    return %c0_i32, %c0_i32_0 : i32, i32
  }
  func.func @transform_3(%arg0: i32, %arg1: i32) -> (i32, i32) {
    %c0_i32 = arith.constant 0 : i32
    %c0_i32_0 = arith.constant 0 : i32
    %c0_i32_1 = arith.constant 0 : i32
    return %c0_i32, %c0_i32_0 : i32, i32
  }
  func.func @transform_4(%arg0: i32, %arg1: i32) -> (i32, i32) {
    %c0_i32 = arith.constant 0 : i32
    %c0_i32_0 = arith.constant 0 : i32
    %c0_i32_1 = arith.constant 0 : i32
    return %c0_i32, %c0_i32_0 : i32, i32
  }
  func.func @transform_5(%arg0: i32, %arg1: i32) -> (i32, i32) {
    %c0_i32 = arith.constant 0 : i32
    %c0_i32_0 = arith.constant 0 : i32
    %c0_i32_1 = arith.constant 0 : i32
    return %c0_i32, %c0_i32_0 : i32, i32
  }
  func.func @transform_6(%arg0: i32, %arg1: i32) -> i32 {
    %c0_i32 = arith.constant 0 : i32
    %c0_i32_0 = arith.constant 0 : i32
    return %c0_i32 : i32
  }
  func.func @transform_7(%arg0: i32, %arg1: i32) -> (i32, i32, i32) {
    %c0_i32 = arith.constant 0 : i32
    %c0_i32_0 = arith.constant 0 : i32
    %c0_i32_1 = arith.constant 0 : i32
    return %arg0, %c0_i32, %c0_i32_0 : i32, i32, i32
  }
}

</mosaic_0001>

<llo_original>
// kernel: discreminator_forward.1
$region0: #{discreminator_forward.1}
  #allocation0 [shape = 'u32[]', space=smem, size = 0x4, offset = 0x4, fixed_abs, tag = 'smem constant byte address 0x4 - core index']
  #allocation1 [shape = 'u32[72,128]{1,0:T(1,128)}', space=vmem, size = 0x9000, scoped, tag = 'internal scratch']
  #allocation2 [shape = 'f32[8,256]{1,0:T(8,128)}', space=vmem, size = 0x2000, scoped, tag = 'scratch operand']
  #allocation3 [shape = 'f32[1]{0:T(128)S(6)}', space=smem, size = 0x200, scoped, tag = 'scoped memory for discreminator_forward.1']
  %s0 = inlined_call_operand.vmem [shape: f32[8,1024], index: 0, kind: input, shape index: {}]
  %s1 = inlined_call_operand.hbm [shape: bf16[1024,256], index: 1, kind: input, shape index: {}]
  %s2 = inlined_call_operand.vmem [shape: f32[1,256], index: 2, kind: input, shape index: {}]
  %s3 = inlined_call_operand.hbm [shape: bf16[256,256], index: 3, kind: input, shape index: {}]
  %s4 = inlined_call_operand.vmem [shape: f32[1,256], index: 4, kind: input, shape index: {}]
  %s5 = inlined_call_operand.vmem [shape: bf16[16,256], index: 5, kind: input, shape index: {}]
  %s6 = inlined_call_operand.<no memory space> [shape: f32[1], index: 6, kind: input, shape index: {}]
  %s7 = inlined_call_operand.vmem [shape: f32[1,1,8], index: 7, kind: output, shape index: {}]
  %s8 = sld [smem:[#allocation0]]
  $region54: #{discreminator_forward.1} parent=0
    _
  %s10 = ssub.s32 1, %s8
  %s11 = scalar_select 0, %s10, %s8
  %12 = sst [smem:[#allocation3]] %s6
  $region1: #{discreminator_forward.1} parent=0
    #allocation4 [shape = 'u8[524288]{0}', space=vmem, size = 0x80000, scoped, tag = 'input window, operand 1, single buffered']
    #allocation5 [shape = 's32[1]{0}', space=sflag, size = 0x4, scoped, tag = 'scoped memory for discreminator_forward.1']
    #allocation6 [shape = 'u8[131072]{0}', space=vmem, size = 0x20000, scoped, tag = 'input window, operand 3, single buffered']
    #allocation7 [shape = 's32[1]{0}', space=sflag, size = 0x4, scoped, tag = 'scoped memory for discreminator_forward.1']
    %13 = vsyncpa [#allocation5], 0
    %14 = vsyncpa [#allocation7], 0
    // Predicated region
    $region2: #{discreminator_forward.1} parent=1 // pred_check
      _
    $region3: #{discreminator_forward.1} parent=1 // pred_check_branch
      %16 = sbr.rel (0) target = $region5
    $region4: #{discreminator_forward.1} parent=1 // pred_region
      _
    $region5: #{discreminator_forward.1} parent=1 // pred_fallthru
      _
    // Predicated region
    $region6: #{discreminator_forward.1} parent=1 // pred_check
      _
    $region7: #{discreminator_forward.1} parent=1 // pred_check_branch
      %18 = sbr.rel (0) target = $region9
    $region8: #{discreminator_forward.1} parent=1 // pred_region
      %20 = vsyncadd [#allocation5], 0
      %s21 = sshll.u32 %s1, 4
      %s22 = int_to_ptr.hbm [resolvable:$true] %s21
      %s23 = sshll.u32 [#allocation4], 4
      %s24 = int_to_ptr.vmem [resolvable:$true] %s23
      %29 = dma.hbm_to_vmem [thread:$0]  %s22, 16384, %s24, [#allocation5], 128, 128, 8
    $region9: #{discreminator_forward.1} parent=1 // pred_fallthru
      _
    // Predicated region
    $region10: #{discreminator_forward.1} parent=1 // pred_check
      _
    $region11: #{discreminator_forward.1} parent=1 // pred_check_branch
      %31 = sbr.rel (0) target = $region13
    $region12: #{discreminator_forward.1} parent=1 // pred_region
      _
    $region13: #{discreminator_forward.1} parent=1 // pred_fallthru
      _
    // Predicated region
    $region14: #{discreminator_forward.1} parent=1 // pred_check
      _
    $region15: #{discreminator_forward.1} parent=1 // pred_check_branch
      %33 = sbr.rel (0) target = $region17
    $region16: #{discreminator_forward.1} parent=1 // pred_region
      %35 = vsyncadd [#allocation7], 0
      %s36 = sshll.u32 %s3, 4
      %s37 = int_to_ptr.hbm [resolvable:$true] %s36
      %s38 = sshll.u32 [#allocation6], 4
      %s39 = int_to_ptr.vmem [resolvable:$true] %s38
      %44 = dma.hbm_to_vmem [thread:$0]  %s37, 4096, %s39, [#allocation7], 128, 128, 8
    $region17: #{discreminator_forward.1} parent=1 // pred_fallthru
      _
    // Predicated region
    $region18: #{discreminator_forward.1} parent=1 // pred_check
      _
    $region19: #{discreminator_forward.1} parent=1 // pred_check_branch
      %46 = sbr.rel (0) target = $region21
    $region20: #{discreminator_forward.1} parent=1 // pred_region
      _
    $region21: #{discreminator_forward.1} parent=1 // pred_fallthru
      _
    // Predicated region
    $region22: #{discreminator_forward.1} parent=1 // pred_check
      _
    $region23: #{discreminator_forward.1} parent=1 // pred_check_branch
      %48 = sbr.rel (0) target = $region25
    $region24: #{discreminator_forward.1} parent=1 // pred_region
      _
    $region25: #{discreminator_forward.1} parent=1 // pred_fallthru
      _
    // Predicated region
    $region26: #{discreminator_forward.1} parent=1 // pred_check
      _
    $region27: #{discreminator_forward.1} parent=1 // pred_check_branch
      %50 = sbr.rel (0) target = $region29
    $region28: #{discreminator_forward.1} parent=1 // pred_region
      _
    $region29: #{discreminator_forward.1} parent=1 // pred_fallthru
      _
    // Predicated region
    $region30: #{discreminator_forward.1} parent=1 // pred_check
      _
    $region31: #{discreminator_forward.1} parent=1 // pred_check_branch
      %52 = sbr.rel (0) target = $region33
    $region32: #{discreminator_forward.1} parent=1 // pred_region
      %54 = dma.done [#allocation5], 16384
    $region33: #{discreminator_forward.1} parent=1 // pred_fallthru
      _
    // Predicated region
    $region34: #{discreminator_forward.1} parent=1 // pred_check
      _
    $region35: #{discreminator_forward.1} parent=1 // pred_check_branch
      %56 = sbr.rel (0) target = $region37
    $region36: #{discreminator_forward.1} parent=1 // pred_region
      %58 = dma.done [#allocation7], 4096
    $region37: #{discreminator_forward.1} parent=1 // pred_fallthru
      _
    %p60 = scmp.eq.s32.totalorder 0, 0
    // Predicated region
    $region38: #{discreminator_forward.1} parent=1 // pred_check
      %p61 = pneg %p60
    $region39: #{discreminator_forward.1} parent=1 // pred_check_branch
      %63 = sbr.rel (%p61) target = $region41
    $region40: #{discreminator_forward.1} parent=1 // pred_region
      %64 = vst [vmem:[#allocation2] sm:$0xff] 0.0
      %65 = vst [vmem:[#allocation2 + $0x8] sm:$0xff] 0.0
    $region41: #{discreminator_forward.1} parent=1 // pred_fallthru
      _
    %v66 = vld [vmem:[%s0] sm:$0xff]
    %v67 = vld [vmem:[%s0 + $0x8] sm:$0xff]
    %v68 = vld [vmem:[%s0 + $0x10] sm:$0xff]
    %v69 = vld [vmem:[%s0 + $0x18] sm:$0xff]
    %v70 = vld [vmem:[%s0 + $0x20] sm:$0xff]
    %v71 = vld [vmem:[%s0 + $0x28] sm:$0xff]
    %v72 = vld [vmem:[%s0 + $0x30] sm:$0xff]
    %v73 = vld [vmem:[%s0 + $0x38] sm:$0xff]
    %v74 = vld [vmem:[#allocation2] sm:$0xff]
    %v75 = vld [vmem:[#allocation2 + $0x8] sm:$0xff]
    %v76 = vpack.c.bf16 %v66, %v66
    %v77 = vpack.c.bf16 %v67, %v67
    %v78 = vpack.c.bf16 %v68, %v68
    %v79 = vpack.c.bf16 %v69, %v69
    %v80 = vpack.c.bf16 %v70, %v70
    %v81 = vpack.c.bf16 %v71, %v71
    %v82 = vpack.c.bf16 %v72, %v72
    %v83 = vpack.c.bf16 %v73, %v73
    %v84 = vld [vmem:[#allocation4] sm:$0xff]
    %v85 = vld [vmem:[#allocation4 + $0x8] sm:$0xff]
    %v86 = vld [vmem:[#allocation4 + $0x10] sm:$0xff]
    %v87 = vld [vmem:[#allocation4 + $0x18] sm:$0xff]
    %v88 = vld [vmem:[#allocation4 + $0x20] sm:$0xff]
    %v89 = vld [vmem:[#allocation4 + $0x28] sm:$0xff]
    %v90 = vld [vmem:[#allocation4 + $0x30] sm:$0xff]
    %v91 = vld [vmem:[#allocation4 + $0x38] sm:$0xff]
    %v92 = vld [vmem:[#allocation4 + $0x40] sm:$0xff]
    %v93 = vld [vmem:[#allocation4 + $0x48] sm:$0xff]
    %v94 = vld [vmem:[#allocation4 + $0x50] sm:$0xff]
    %v95 = vld [vmem:[#allocation4 + $0x58] sm:$0xff]
    %v96 = vld [vmem:[#allocation4 + $0x60] sm:$0xff]
    %v97 = vld [vmem:[#allocation4 + $0x68] sm:$0xff]
    %v98 = vld [vmem:[#allocation4 + $0x70] sm:$0xff]
    %v99 = vld [vmem:[#allocation4 + $0x78] sm:$0xff]
    %v100 = vld [vmem:[#allocation4 + $0x80] sm:$0xff]
    %v101 = vld [vmem:[#allocation4 + $0x88] sm:$0xff]
    %v102 = vld [vmem:[#allocation4 + $0x90] sm:$0xff]
    %v103 = vld [vmem:[#allocation4 + $0x98] sm:$0xff]
    %v104 = vld [vmem:[#allocation4 + $0xa0] sm:$0xff]
    %v105 = vld [vmem:[#allocation4 + $0xa8] sm:$0xff]
    %v106 = vld [vmem:[#allocation4 + $0xb0] sm:$0xff]
    %v107 = vld [vmem:[#allocation4 + $0xb8] sm:$0xff]
    %v108 = vld [vmem:[#allocation4 + $0xc0] sm:$0xff]
    %v109 = vld [vmem:[#allocation4 + $0xc8] sm:$0xff]
    %v110 = vld [vmem:[#allocation4 + $0xd0] sm:$0xff]
    %v111 = vld [vmem:[#allocation4 + $0xd8] sm:$0xff]
    %v112 = vld [vmem:[#allocation4 + $0xe0] sm:$0xff]
    %v113 = vld [vmem:[#allocation4 + $0xe8] sm:$0xff]
    %v114 = vld [vmem:[#allocation4 + $0xf0] sm:$0xff]
    %v115 = vld [vmem:[#allocation4 + $0xf8] sm:$0xff]
    %v116 = vld [vmem:[#allocation4 + $0x100] sm:$0xff]
    %v117 = vld [vmem:[#allocation4 + $0x108] sm:$0xff]
    %v118 = vld [vmem:[#allocation4 + $0x110] sm:$0xff]
    %v119 = vld [vmem:[#allocation4 + $0x118] sm:$0xff]
    %v120 = vld [vmem:[#allocation4 + $0x120] sm:$0xff]
    %v121 = vld [vmem:[#allocation4 + $0x128] sm:$0xff]
    %v122 = vld [vmem:[#allocation4 + $0x130] sm:$0xff]
    %v123 = vld [vmem:[#allocation4 + $0x138] sm:$0xff]
    %v124 = vld [vmem:[#allocation4 + $0x140] sm:$0xff]
    %v125 = vld [vmem:[#allocation4 + $0x148] sm:$0xff]
    %v126 = vld [vmem:[#allocation4 + $0x150] sm:$0xff]
    %v127 = vld [vmem:[#allocation4 + $0x158] sm:$0xff]
    %v128 = vld [vmem:[#allocation4 + $0x160] sm:$0xff]
    %v129 = vld [vmem:[#allocation4 + $0x168] sm:$0xff]
    %v130 = vld [vmem:[#allocation4 + $0x170] sm:$0xff]
    %v131 = vld [vmem:[#allocation4 + $0x178] sm:$0xff]
    %v132 = vld [vmem:[#allocation4 + $0x180] sm:$0xff]
    %v133 = vld [vmem:[#allocation4 + $0x188] sm:$0xff]
    %v134 = vld [vmem:[#allocation4 + $0x190] sm:$0xff]
    %v135 = vld [vmem:[#allocation4 + $0x198] sm:$0xff]
    %v136 = vld [vmem:[#allocation4 + $0x1a0] sm:$0xff]
    %v137 = vld [vmem:[#allocation4 + $0x1a8] sm:$0xff]
    %v138 = vld [vmem:[#allocation4 + $0x1b0] sm:$0xff]
    %v139 = vld [vmem:[#allocation4 + $0x1b8] sm:$0xff]
    %v140 = vld [vmem:[#allocation4 + $0x1c0] sm:$0xff]
    %v141 = vld [vmem:[#allocation4 + $0x1c8] sm:$0xff]
    %v142 = vld [vmem:[#allocation4 + $0x1d0] sm:$0xff]
    %v143 = vld [vmem:[#allocation4 + $0x1d8] sm:$0xff]
    %v144 = vld [vmem:[#allocation4 + $0x1e0] sm:$0xff]
    %v145 = vld [vmem:[#allocation4 + $0x1e8] sm:$0xff]
    %v146 = vld [vmem:[#allocation4 + $0x1f0] sm:$0xff]
    %v147 = vld [vmem:[#allocation4 + $0x1f8] sm:$0xff]
    %v148 = vld [vmem:[#allocation4 + $0x200] sm:$0xff]
    %v149 = vld [vmem:[#allocation4 + $0x208] sm:$0xff]
    %v150 = vld [vmem:[#allocation4 + $0x210] sm:$0xff]
    %v151 = vld [vmem:[#allocation4 + $0x218] sm:$0xff]
    %v152 = vld [vmem:[#allocation4 + $0x220] sm:$0xff]
    %v153 = vld [vmem:[#allocation4 + $0x228] sm:$0xff]
    %v154 = vld [vmem:[#allocation4 + $0x230] sm:$0xff]
    %v155 = vld [vmem:[#allocation4 + $0x238] sm:$0xff]
    %v156 = vld [vmem:[#allocation4 + $0x240] sm:$0xff]
    %v157 = vld [vmem:[#allocation4 + $0x248] sm:$0xff]
    %v158 = vld [vmem:[#allocation4 + $0x250] sm:$0xff]
    %v159 = vld [vmem:[#allocation4 + $0x258] sm:$0xff]
    %v160 = vld [vmem:[#allocation4 + $0x260] sm:$0xff]
    %v161 = vld [vmem:[#allocation4 + $0x268] sm:$0xff]
    %v162 = vld [vmem:[#allocation4 + $0x270] sm:$0xff]
    %v163 = vld [vmem:[#allocation4 + $0x278] sm:$0xff]
    %v164 = vld [vmem:[#allocation4 + $0x280] sm:$0xff]
    %v165 = vld [vmem:[#allocation4 + $0x288] sm:$0xff]
    %v166 = vld [vmem:[#allocation4 + $0x290] sm:$0xff]
    %v167 = vld [vmem:[#allocation4 + $0x298] sm:$0xff]
    %v168 = vld [vmem:[#allocation4 + $0x2a0] sm:$0xff]
    %v169 = vld [vmem:[#allocation4 + $0x2a8] sm:$0xff]
    %v170 = vld [vmem:[#allocation4 + $0x2b0] sm:$0xff]
    %v171 = vld [vmem:[#allocation4 + $0x2b8] sm:$0xff]
    %v172 = vld [vmem:[#allocation4 + $0x2c0] sm:$0xff]
    %v173 = vld [vmem:[#allocation4 + $0x2c8] sm:$0xff]
    %v174 = vld [vmem:[#allocation4 + $0x2d0] sm:$0xff]
    %v175 = vld [vmem:[#allocation4 + $0x2d8] sm:$0xff]
    %v176 = vld [vmem:[#allocation4 + $0x2e0] sm:$0xff]
    %v177 = vld [vmem:[#allocation4 + $0x2e8] sm:$0xff]
    %v178 = vld [vmem:[#allocation4 + $0x2f0] sm:$0xff]
    %v179 = vld [vmem:[#allocation4 + $0x2f8] sm:$0xff]
    %v180 = vld [vmem:[#allocation4 + $0x300] sm:$0xff]
    %v181 = vld [vmem:[#allocation4 + $0x308] sm:$0xff]
    %v182 = vld [vmem:[#allocation4 + $0x310] sm:$0xff]
    %v183 = vld [vmem:[#allocation4 + $0x318] sm:$0xff]
    %v184 = vld [vmem:[#allocation4 + $0x320] sm:$0xff]
    %v185 = vld [vmem:[#allocation4 + $0x328] sm:$0xff]
    %v186 = vld [vmem:[#allocation4 + $0x330] sm:$0xff]
    %v187 = vld [vmem:[#allocation4 + $0x338] sm:$0xff]
    %v188 = vld [vmem:[#allocation4 + $0x340] sm:$0xff]
    %v189 = vld [vmem:[#allocation4 + $0x348] sm:$0xff]
    %v190 = vld [vmem:[#allocation4 + $0x350] sm:$0xff]
    %v191 = vld [vmem:[#allocation4 + $0x358] sm:$0xff]
    %v192 = vld [vmem:[#allocation4 + $0x360] sm:$0xff]
    %v193 = vld [vmem:[#allocation4 + $0x368] sm:$0xff]
    %v194 = vld [vmem:[#allocation4 + $0x370] sm:$0xff]
    %v195 = vld [vmem:[#allocation4 + $0x378] sm:$0xff]
    %v196 = vld [vmem:[#allocation4 + $0x380] sm:$0xff]
    %v197 = vld [vmem:[#allocation4 + $0x388] sm:$0xff]
    %v198 = vld [vmem:[#allocation4 + $0x390] sm:$0xff]
    %v199 = vld [vmem:[#allocation4 + $0x398] sm:$0xff]
    %v200 = vld [vmem:[#allocation4 + $0x3a0] sm:$0xff]
    %v201 = vld [vmem:[#allocation4 + $0x3a8] sm:$0xff]
    %v202 = vld [vmem:[#allocation4 + $0x3b0] sm:$0xff]
    %v203 = vld [vmem:[#allocation4 + $0x3b8] sm:$0xff]
    %v204 = vld [vmem:[#allocation4 + $0x3c0] sm:$0xff]
    %v205 = vld [vmem:[#allocation4 + $0x3c8] sm:$0xff]
    %v206 = vld [vmem:[#allocation4 + $0x3d0] sm:$0xff]
    %v207 = vld [vmem:[#allocation4 + $0x3d8] sm:$0xff]
    %v208 = vld [vmem:[#allocation4 + $0x3e0] sm:$0xff]
    %v209 = vld [vmem:[#allocation4 + $0x3e8] sm:$0xff]
    %v210 = vld [vmem:[#allocation4 + $0x3f0] sm:$0xff]
    %v211 = vld [vmem:[#allocation4 + $0x3f8] sm:$0xff]
    %v340 = vunpack.c.l.b16 %v84
    %v341 = vunpack.c.h.b16 %v84
    %v342 = vunpack.c.l.b16 %v85
    %v343 = vunpack.c.h.b16 %v85
    %v344 = vunpack.c.l.b16 %v86
    %v345 = vunpack.c.h.b16 %v86
    %v346 = vunpack.c.l.b16 %v87
    %v347 = vunpack.c.h.b16 %v87
    %v348 = vunpack.c.l.b16 %v88
    %v349 = vunpack.c.h.b16 %v88
    %v350 = vunpack.c.l.b16 %v89
    %v351 = vunpack.c.h.b16 %v89
    %v352 = vunpack.c.l.b16 %v90
    %v353 = vunpack.c.h.b16 %v90
    %v354 = vunpack.c.l.b16 %v91
    %v355 = vunpack.c.h.b16 %v91
    %v356 = vunpack.c.l.b16 %v92
    %v357 = vunpack.c.h.b16 %v92
    %v358 = vunpack.c.l.b16 %v93
    %v359 = vunpack.c.h.b16 %v93
    %v360 = vunpack.c.l.b16 %v94
    %v361 = vunpack.c.h.b16 %v94
    %v362 = vunpack.c.l.b16 %v95
    %v363 = vunpack.c.h.b16 %v95
    %v364 = vunpack.c.l.b16 %v96
    %v365 = vunpack.c.h.b16 %v96
    %v366 = vunpack.c.l.b16 %v97
    %v367 = vunpack.c.h.b16 %v97
    %v368 = vunpack.c.l.b16 %v98
    %v369 = vunpack.c.h.b16 %v98
    %v370 = vunpack.c.l.b16 %v99
    %v371 = vunpack.c.h.b16 %v99
    %v372 = vunpack.c.l.b16 %v100
    %v373 = vunpack.c.h.b16 %v100
    %v374 = vunpack.c.l.b16 %v101
    %v375 = vunpack.c.h.b16 %v101
    %v376 = vunpack.c.l.b16 %v102
    %v377 = vunpack.c.h.b16 %v102
    %v378 = vunpack.c.l.b16 %v103
    %v379 = vunpack.c.h.b16 %v103
    %v380 = vunpack.c.l.b16 %v104
    %v381 = vunpack.c.h.b16 %v104
    %v382 = vunpack.c.l.b16 %v105
    %v383 = vunpack.c.h.b16 %v105
    %v384 = vunpack.c.l.b16 %v106
    %v385 = vunpack.c.h.b16 %v106
    %v386 = vunpack.c.l.b16 %v107
    %v387 = vunpack.c.h.b16 %v107
    %v388 = vunpack.c.l.b16 %v108
    %v389 = vunpack.c.h.b16 %v108
    %v390 = vunpack.c.l.b16 %v109
    %v391 = vunpack.c.h.b16 %v109
    %v392 = vunpack.c.l.b16 %v110
    %v393 = vunpack.c.h.b16 %v110
    %v394 = vunpack.c.l.b16 %v111
    %v395 = vunpack.c.h.b16 %v111
    %v396 = vunpack.c.l.b16 %v112
    %v397 = vunpack.c.h.b16 %v112
    %v398 = vunpack.c.l.b16 %v113
    %v399 = vunpack.c.h.b16 %v113
    %v400 = vunpack.c.l.b16 %v114
    %v401 = vunpack.c.h.b16 %v114
    %v402 = vunpack.c.l.b16 %v115
    %v403 = vunpack.c.h.b16 %v115
    %v404 = vunpack.c.l.b16 %v116
    %v405 = vunpack.c.h.b16 %v116
    %v406 = vunpack.c.l.b16 %v117
    %v407 = vunpack.c.h.b16 %v117
    %v408 = vunpack.c.l.b16 %v118
    %v409 = vunpack.c.h.b16 %v118
    %v410 = vunpack.c.l.b16 %v119
    %v411 = vunpack.c.h.b16 %v119
    %v412 = vunpack.c.l.b16 %v120
    %v413 = vunpack.c.h.b16 %v120
    %v414 = vunpack.c.l.b16 %v121
    %v415 = vunpack.c.h.b16 %v121
    %v416 = vunpack.c.l.b16 %v122
    %v417 = vunpack.c.h.b16 %v122
    %v418 = vunpack.c.l.b16 %v123
    %v419 = vunpack.c.h.b16 %v123
    %v420 = vunpack.c.l.b16 %v124
    %v421 = vunpack.c.h.b16 %v124
    %v422 = vunpack.c.l.b16 %v125
    %v423 = vunpack.c.h.b16 %v125
    %v424 = vunpack.c.l.b16 %v126
    %v425 = vunpack.c.h.b16 %v126
    %v426 = vunpack.c.l.b16 %v127
    %v427 = vunpack.c.h.b16 %v127
    %v428 = vunpack.c.l.b16 %v128
    %v429 = vunpack.c.h.b16 %v128
    %v430 = vunpack.c.l.b16 %v129
    %v431 = vunpack.c.h.b16 %v129
    %v432 = vunpack.c.l.b16 %v130
    %v433 = vunpack.c.h.b16 %v130
    %v434 = vunpack.c.l.b16 %v131
    %v435 = vunpack.c.h.b16 %v131
    %v436 = vunpack.c.l.b16 %v132
    %v437 = vunpack.c.h.b16 %v132
    %v438 = vunpack.c.l.b16 %v133
    %v439 = vunpack.c.h.b16 %v133
    %v440 = vunpack.c.l.b16 %v134
    %v441 = vunpack.c.h.b16 %v134
    %v442 = vunpack.c.l.b16 %v135
    %v443 = vunpack.c.h.b16 %v135
    %v444 = vunpack.c.l.b16 %v136
    %v445 = vunpack.c.h.b16 %v136
    %v446 = vunpack.c.l.b16 %v137
    %v447 = vunpack.c.h.b16 %v137
    %v448 = vunpack.c.l.b16 %v138
    %v449 = vunpack.c.h.b16 %v138
    %v450 = vunpack.c.l.b16 %v139
    %v451 = vunpack.c.h.b16 %v139
    %v452 = vunpack.c.l.b16 %v140
    %v453 = vunpack.c.h.b16 %v140
    %v454 = vunpack.c.l.b16 %v141
    %v455 = vunpack.c.h.b16 %v141
    %v456 = vunpack.c.l.b16 %v142
    %v457 = vunpack.c.h.b16 %v142
    %v458 = vunpack.c.l.b16 %v143
    %v459 = vunpack.c.h.b16 %v143
    %v460 = vunpack.c.l.b16 %v144
    %v461 = vunpack.c.h.b16 %v144
    %v462 = vunpack.c.l.b16 %v145
    %v463 = vunpack.c.h.b16 %v145
    %v464 = vunpack.c.l.b16 %v146
    %v465 = vunpack.c.h.b16 %v146
    %v466 = vunpack.c.l.b16 %v147
    %v467 = vunpack.c.h.b16 %v147
    %v468 = vunpack.c.l.b16 %v148
    %v469 = vunpack.c.h.b16 %v148
    %v470 = vunpack.c.l.b16 %v149
    %v471 = vunpack.c.h.b16 %v149
    %v472 = vunpack.c.l.b16 %v150
    %v473 = vunpack.c.h.b16 %v150
    %v474 = vunpack.c.l.b16 %v151
    %v475 = vunpack.c.h.b16 %v151
    %v476 = vunpack.c.l.b16 %v152
    %v477 = vunpack.c.h.b16 %v152
    %v478 = vunpack.c.l.b16 %v153
    %v479 = vunpack.c.h.b16 %v153
    %v480 = vunpack.c.l.b16 %v154
    %v481 = vunpack.c.h.b16 %v154
    %v482 = vunpack.c.l.b16 %v155
    %v483 = vunpack.c.h.b16 %v155
    %v484 = vunpack.c.l.b16 %v156
    %v485 = vunpack.c.h.b16 %v156
    %v486 = vunpack.c.l.b16 %v157
    %v487 = vunpack.c.h.b16 %v157
    %v488 = vunpack.c.l.b16 %v158
    %v489 = vunpack.c.h.b16 %v158
    %v490 = vunpack.c.l.b16 %v159
    %v491 = vunpack.c.h.b16 %v159
    %v492 = vunpack.c.l.b16 %v160
    %v493 = vunpack.c.h.b16 %v160
    %v494 = vunpack.c.l.b16 %v161
    %v495 = vunpack.c.h.b16 %v161
    %v496 = vunpack.c.l.b16 %v162
    %v497 = vunpack.c.h.b16 %v162
    %v498 = vunpack.c.l.b16 %v163
    %v499 = vunpack.c.h.b16 %v163
    %v500 = vunpack.c.l.b16 %v164
    %v501 = vunpack.c.h.b16 %v164
    %v502 = vunpack.c.l.b16 %v165
    %v503 = vunpack.c.h.b16 %v165
    %v504 = vunpack.c.l.b16 %v166
    %v505 = vunpack.c.h.b16 %v166
    %v506 = vunpack.c.l.b16 %v167
    %v507 = vunpack.c.h.b16 %v167
    %v508 = vunpack.c.l.b16 %v168
    %v509 = vunpack.c.h.b16 %v168
    %v510 = vunpack.c.l.b16 %v169
    %v511 = vunpack.c.h.b16 %v169
    %v512 = vunpack.c.l.b16 %v170
    %v513 = vunpack.c.h.b16 %v170
    %v514 = vunpack.c.l.b16 %v171
    %v515 = vunpack.c.h.b16 %v171
    %v516 = vunpack.c.l.b16 %v172
    %v517 = vunpack.c.h.b16 %v172
    %v518 = vunpack.c.l.b16 %v173
    %v519 = vunpack.c.h.b16 %v173
    %v520 = vunpack.c.l.b16 %v174
    %v521 = vunpack.c.h.b16 %v174
    %v522 = vunpack.c.l.b16 %v175
    %v523 = vunpack.c.h.b16 %v175
    %v524 = vunpack.c.l.b16 %v176
    %v525 = vunpack.c.h.b16 %v176
    %v526 = vunpack.c.l.b16 %v177
    %v527 = vunpack.c.h.b16 %v177
    %v528 = vunpack.c.l.b16 %v178
    %v529 = vunpack.c.h.b16 %v178
    %v530 = vunpack.c.l.b16 %v179
    %v531 = vunpack.c.h.b16 %v179
    %v532 = vunpack.c.l.b16 %v180
    %v533 = vunpack.c.h.b16 %v180
    %v534 = vunpack.c.l.b16 %v181
    %v535 = vunpack.c.h.b16 %v181
    %v536 = vunpack.c.l.b16 %v182
    %v537 = vunpack.c.h.b16 %v182
    %v538 = vunpack.c.l.b16 %v183
    %v539 = vunpack.c.h.b16 %v183
    %v540 = vunpack.c.l.b16 %v184
    %v541 = vunpack.c.h.b16 %v184
    %v542 = vunpack.c.l.b16 %v185
    %v543 = vunpack.c.h.b16 %v185
    %v544 = vunpack.c.l.b16 %v186
    %v545 = vunpack.c.h.b16 %v186
    %v546 = vunpack.c.l.b16 %v187
    %v547 = vunpack.c.h.b16 %v187
    %v548 = vunpack.c.l.b16 %v188
    %v549 = vunpack.c.h.b16 %v188
    %v550 = vunpack.c.l.b16 %v189
    %v551 = vunpack.c.h.b16 %v189
    %v552 = vunpack.c.l.b16 %v190
    %v553 = vunpack.c.h.b16 %v190
    %v554 = vunpack.c.l.b16 %v191
    %v555 = vunpack.c.h.b16 %v191
    %v556 = vunpack.c.l.b16 %v192
    %v557 = vunpack.c.h.b16 %v192
    %v558 = vunpack.c.l.b16 %v193
    %v559 = vunpack.c.h.b16 %v193
    %v560 = vunpack.c.l.b16 %v194
    %v561 = vunpack.c.h.b16 %v194
    %v562 = vunpack.c.l.b16 %v195
    %v563 = vunpack.c.h.b16 %v195
    %v564 = vunpack.c.l.b16 %v196
    %v565 = vunpack.c.h.b16 %v196
    %v566 = vunpack.c.l.b16 %v197
    %v567 = vunpack.c.h.b16 %v197
    %v568 = vunpack.c.l.b16 %v198
    %v569 = vunpack.c.h.b16 %v198
    %v570 = vunpack.c.l.b16 %v199
    %v571 = vunpack.c.h.b16 %v199
    %v572 = vunpack.c.l.b16 %v200
    %v573 = vunpack.c.h.b16 %v200
    %v574 = vunpack.c.l.b16 %v201
    %v575 = vunpack.c.h.b16 %v201
    %v576 = vunpack.c.l.b16 %v202
    %v577 = vunpack.c.h.b16 %v202
    %v578 = vunpack.c.l.b16 %v203
    %v579 = vunpack.c.h.b16 %v203
    %v580 = vunpack.c.l.b16 %v204
    %v581 = vunpack.c.h.b16 %v204
    %v582 = vunpack.c.l.b16 %v205
    %v583 = vunpack.c.h.b16 %v205
    %v584 = vunpack.c.l.b16 %v206
    %v585 = vunpack.c.h.b16 %v206
    %v586 = vunpack.c.l.b16 %v207
    %v587 = vunpack.c.h.b16 %v207
    %v588 = vunpack.c.l.b16 %v208
    %v589 = vunpack.c.h.b16 %v208
    %v590 = vunpack.c.l.b16 %v209
    %v591 = vunpack.c.h.b16 %v209
    %v592 = vunpack.c.l.b16 %v210
    %v593 = vunpack.c.h.b16 %v210
    %v594 = vunpack.c.l.b16 %v211
    %v595 = vunpack.c.h.b16 %v211
    %v596 = vpack.c.b16 %v342, %v340
    %v597 = vpack.c.b16 %v343, %v341
    %v598 = vpack.c.b16 %v346, %v344
    %v599 = vpack.c.b16 %v347, %v345
    %v600 = vpack.c.b16 %v350, %v348
    %v601 = vpack.c.b16 %v351, %v349
    %v602 = vpack.c.b16 %v354, %v352
    %v603 = vpack.c.b16 %v355, %v353
    %v604 = vpack.c.b16 %v358, %v356
    %v605 = vpack.c.b16 %v359, %v357
    %v606 = vpack.c.b16 %v362, %v360
    %v607 = vpack.c.b16 %v363, %v361
    %v608 = vpack.c.b16 %v366, %v364
    %v609 = vpack.c.b16 %v367, %v365
    %v610 = vpack.c.b16 %v370, %v368
    %v611 = vpack.c.b16 %v371, %v369
    %v612 = vpack.c.b16 %v374, %v372
    %v613 = vpack.c.b16 %v375, %v373
    %v614 = vpack.c.b16 %v378, %v376
    %v615 = vpack.c.b16 %v379, %v377
    %v616 = vpack.c.b16 %v382, %v380
    %v617 = vpack.c.b16 %v383, %v381
    %v618 = vpack.c.b16 %v386, %v384
    %v619 = vpack.c.b16 %v387, %v385
    %v620 = vpack.c.b16 %v390, %v388
    %v621 = vpack.c.b16 %v391, %v389
    %v622 = vpack.c.b16 %v394, %v392
    %v623 = vpack.c.b16 %v395, %v393
    %v624 = vpack.c.b16 %v398, %v396
    %v625 = vpack.c.b16 %v399, %v397
    %v626 = vpack.c.b16 %v402, %v400
    %v627 = vpack.c.b16 %v403, %v401
    %v628 = vpack.c.b16 %v406, %v404
    %v629 = vpack.c.b16 %v407, %v405
    %v630 = vpack.c.b16 %v410, %v408
    %v631 = vpack.c.b16 %v411, %v409
    %v632 = vpack.c.b16 %v414, %v412
    %v633 = vpack.c.b16 %v415, %v413
    %v634 = vpack.c.b16 %v418, %v416
    %v635 = vpack.c.b16 %v419, %v417
    %v636 = vpack.c.b16 %v422, %v420
    %v637 = vpack.c.b16 %v423, %v421
    %v638 = vpack.c.b16 %v426, %v424
    %v639 = vpack.c.b16 %v427, %v425
    %v640 = vpack.c.b16 %v430, %v428
    %v641 = vpack.c.b16 %v431, %v429
    %v642 = vpack.c.b16 %v434, %v432
    %v643 = vpack.c.b16 %v435, %v433
    %v644 = vpack.c.b16 %v438, %v436
    %v645 = vpack.c.b16 %v439, %v437
    %v646 = vpack.c.b16 %v442, %v440
    %v647 = vpack.c.b16 %v443, %v441
    %v648 = vpack.c.b16 %v446, %v444
    %v649 = vpack.c.b16 %v447, %v445
    %v650 = vpack.c.b16 %v450, %v448
    %v651 = vpack.c.b16 %v451, %v449
    %v652 = vpack.c.b16 %v454, %v452
    %v653 = vpack.c.b16 %v455, %v453
    %v654 = vpack.c.b16 %v458, %v456
    %v655 = vpack.c.b16 %v459, %v457
    %v656 = vpack.c.b16 %v462, %v460
    %v657 = vpack.c.b16 %v463, %v461
    %v658 = vpack.c.b16 %v466, %v464
    %v659 = vpack.c.b16 %v467, %v465
    %v660 = vpack.c.b16 %v470, %v468
    %v661 = vpack.c.b16 %v471, %v469
    %v662 = vpack.c.b16 %v474, %v472
    %v663 = vpack.c.b16 %v475, %v473
    %v664 = vpack.c.b16 %v478, %v476
    %v665 = vpack.c.b16 %v479, %v477
    %v666 = vpack.c.b16 %v482, %v480
    %v667 = vpack.c.b16 %v483, %v481
    %v668 = vpack.c.b16 %v486, %v484
    %v669 = vpack.c.b16 %v487, %v485
    %v670 = vpack.c.b16 %v490, %v488
    %v671 = vpack.c.b16 %v491, %v489
    %v672 = vpack.c.b16 %v494, %v492
    %v673 = vpack.c.b16 %v495, %v493
    %v674 = vpack.c.b16 %v498, %v496
    %v675 = vpack.c.b16 %v499, %v497
    %v676 = vpack.c.b16 %v502, %v500
    %v677 = vpack.c.b16 %v503, %v501
    %v678 = vpack.c.b16 %v506, %v504
    %v679 = vpack.c.b16 %v507, %v505
    %v680 = vpack.c.b16 %v510, %v508
    %v681 = vpack.c.b16 %v511, %v509
    %v682 = vpack.c.b16 %v514, %v512
    %v683 = vpack.c.b16 %v515, %v513
    %v684 = vpack.c.b16 %v518, %v516
    %v685 = vpack.c.b16 %v519, %v517
    %v686 = vpack.c.b16 %v522, %v520
    %v687 = vpack.c.b16 %v523, %v521
    %v688 = vpack.c.b16 %v526, %v524
    %v689 = vpack.c.b16 %v527, %v525
    %v690 = vpack.c.b16 %v530, %v528
    %v691 = vpack.c.b16 %v531, %v529
    %v692 = vpack.c.b16 %v534, %v532
    %v693 = vpack.c.b16 %v535, %v533
    %v694 = vpack.c.b16 %v538, %v536
    %v695 = vpack.c.b16 %v539, %v537
    %v696 = vpack.c.b16 %v542, %v540
    %v697 = vpack.c.b16 %v543, %v541
    %v698 = vpack.c.b16 %v546, %v544
    %v699 = vpack.c.b16 %v547, %v545
    %v700 = vpack.c.b16 %v550, %v548
    %v701 = vpack.c.b16 %v551, %v549
    %v702 = vpack.c.b16 %v554, %v552
    %v703 = vpack.c.b16 %v555, %v553
    %v704 = vpack.c.b16 %v558, %v556
    %v705 = vpack.c.b16 %v559, %v557
    %v706 = vpack.c.b16 %v562, %v560
    %v707 = vpack.c.b16 %v563, %v561
    %v708 = vpack.c.b16 %v566, %v564
    %v709 = vpack.c.b16 %v567, %v565
    %v710 = vpack.c.b16 %v570, %v568
    %v711 = vpack.c.b16 %v571, %v569
    %v712 = vpack.c.b16 %v574, %v572
    %v713 = vpack.c.b16 %v575, %v573
    %v714 = vpack.c.b16 %v578, %v576
    %v715 = vpack.c.b16 %v579, %v577
    %v716 = vpack.c.b16 %v582, %v580
    %v717 = vpack.c.b16 %v583, %v581
    %v718 = vpack.c.b16 %v586, %v584
    %v719 = vpack.c.b16 %v587, %v585
    %v720 = vpack.c.b16 %v590, %v588
    %v721 = vpack.c.b16 %v591, %v589
    %v722 = vpack.c.b16 %v594, %v592
    %v723 = vpack.c.b16 %v595, %v593
    %852 = vmatpush.bf16.msra.mxu0 %v610
    %853 = vmatpush.bf16.msra.mxu0 %v608
    %854 = vmatpush.bf16.msra.mxu0 %v606
    %855 = vmatpush.bf16.msra.mxu0 %v604
    %856 = vmatpush.bf16.msra.mxu0 %v602
    %857 = vmatpush.bf16.msra.mxu0 %v600
    %858 = vmatpush.bf16.msra.mxu0 %v598
    %859 = vmatpush.bf16.msra.mxu0 %v596
    %860 = vmatmul.bf16.gmra.mxu0 %v76
    %v861 = vpop.f32.mrf.mxu0
    %v862 = vadd.f32 0.0, %v861
    %v863 = vpop.f32.mrf.mxu0
    %864 = vdwg.mxu0
    %865 = vmatpush.bf16.msra.mxu0 %v626
    %866 = vmatpush.bf16.msra.mxu0 %v624
    %867 = vmatpush.bf16.msra.mxu0 %v622
    %868 = vmatpush.bf16.msra.mxu0 %v620
    %869 = vmatpush.bf16.msra.mxu0 %v618
    %870 = vmatpush.bf16.msra.mxu0 %v616
    %871 = vmatpush.bf16.msra.mxu0 %v614
    %872 = vmatpush.bf16.msra.mxu0 %v612
    %873 = vmatmul.bf16.gmra.mxu0 %v77
    %v874 = vpop.f32.mrf.mxu0
    %v875 = vadd.f32 %v862, %v874
    %v876 = vpop.f32.mrf.mxu0
    %877 = vdwg.mxu0
    %878 = vmatpush.bf16.msra.mxu0 %v642
    %879 = vmatpush.bf16.msra.mxu0 %v640
    %880 = vmatpush.bf16.msra.mxu0 %v638
    %881 = vmatpush.bf16.msra.mxu0 %v636
    %882 = vmatpush.bf16.msra.mxu0 %v634
    %883 = vmatpush.bf16.msra.mxu0 %v632
    %884 = vmatpush.bf16.msra.mxu0 %v630
    %885 = vmatpush.bf16.msra.mxu0 %v628
    %886 = vmatmul.bf16.gmra.mxu0 %v78
    %v887 = vpop.f32.mrf.mxu0
    %v888 = vadd.f32 %v875, %v887
    %v889 = vpop.f32.mrf.mxu0
    %890 = vdwg.mxu0
    %891 = vmatpush.bf16.msra.mxu0 %v658
    %892 = vmatpush.bf16.msra.mxu0 %v656
    %893 = vmatpush.bf16.msra.mxu0 %v654
    %894 = vmatpush.bf16.msra.mxu0 %v652
    %895 = vmatpush.bf16.msra.mxu0 %v650
    %896 = vmatpush.bf16.msra.mxu0 %v648
    %897 = vmatpush.bf16.msra.mxu0 %v646
    %898 = vmatpush.bf16.msra.mxu0 %v644
    %899 = vmatmul.bf16.gmra.mxu0 %v79
    %v900 = vpop.f32.mrf.mxu0
    %v901 = vadd.f32 %v888, %v900
    %v902 = vpop.f32.mrf.mxu0
    %903 = vdwg.mxu0
    %904 = vmatpush.bf16.msra.mxu0 %v674
    %905 = vmatpush.bf16.msra.mxu0 %v672
    %906 = vmatpush.bf16.msra.mxu0 %v670
    %907 = vmatpush.bf16.msra.mxu0 %v668
    %908 = vmatpush.bf16.msra.mxu0 %v666
    %909 = vmatpush.bf16.msra.mxu0 %v664
    %910 = vmatpush.bf16.msra.mxu0 %v662
    %911 = vmatpush.bf16.msra.mxu0 %v660
    %912 = vmatmul.bf16.gmra.mxu0 %v80
    %v913 = vpop.f32.mrf.mxu0
    %v914 = vadd.f32 %v901, %v913
    %v915 = vpop.f32.mrf.mxu0
    %916 = vdwg.mxu0
    %917 = vmatpush.bf16.msra.mxu0 %v690
    %918 = vmatpush.bf16.msra.mxu0 %v688
    %919 = vmatpush.bf16.msra.mxu0 %v686
    %920 = vmatpush.bf16.msra.mxu0 %v684
    %921 = vmatpush.bf16.msra.mxu0 %v682
    %922 = vmatpush.bf16.msra.mxu0 %v680
    %923 = vmatpush.bf16.msra.mxu0 %v678
    %924 = vmatpush.bf16.msra.mxu0 %v676
    %925 = vmatmul.bf16.gmra.mxu0 %v81
    %v926 = vpop.f32.mrf.mxu0
    %v927 = vadd.f32 %v914, %v926
    %v928 = vpop.f32.mrf.mxu0
    %929 = vdwg.mxu0
    %930 = vmatpush.bf16.msra.mxu0 %v706
    %931 = vmatpush.bf16.msra.mxu0 %v704
    %932 = vmatpush.bf16.msra.mxu0 %v702
    %933 = vmatpush.bf16.msra.mxu0 %v700
    %934 = vmatpush.bf16.msra.mxu0 %v698
    %935 = vmatpush.bf16.msra.mxu0 %v696
    %936 = vmatpush.bf16.msra.mxu0 %v694
    %937 = vmatpush.bf16.msra.mxu0 %v692
    %938 = vmatmul.bf16.gmra.mxu0 %v82
    %v939 = vpop.f32.mrf.mxu0
    %v940 = vadd.f32 %v927, %v939
    %v941 = vpop.f32.mrf.mxu0
    %942 = vdwg.mxu0
    %943 = vmatpush.bf16.msra.mxu0 %v722
    %944 = vmatpush.bf16.msra.mxu0 %v720
    %945 = vmatpush.bf16.msra.mxu0 %v718
    %946 = vmatpush.bf16.msra.mxu0 %v716
    %947 = vmatpush.bf16.msra.mxu0 %v714
    %948 = vmatpush.bf16.msra.mxu0 %v712
    %949 = vmatpush.bf16.msra.mxu0 %v710
    %950 = vmatpush.bf16.msra.mxu0 %v708
    %951 = vmatmul.bf16.gmra.mxu0 %v83
    %v952 = vpop.f32.mrf.mxu0
    %v953 = vadd.f32 %v940, %v952
    %v954 = vpop.f32.mrf.mxu0
    %955 = vdwg.mxu0
    %956 = vmatpush.bf16.msra.mxu0 %v611
    %957 = vmatpush.bf16.msra.mxu0 %v609
    %958 = vmatpush.bf16.msra.mxu0 %v607
    %959 = vmatpush.bf16.msra.mxu0 %v605
    %960 = vmatpush.bf16.msra.mxu0 %v603
    %961 = vmatpush.bf16.msra.mxu0 %v601
    %962 = vmatpush.bf16.msra.mxu0 %v599
    %963 = vmatpush.bf16.msra.mxu0 %v597
    %964 = vmatmul.bf16.gmra.mxu0 %v76
    %v965 = vpop.f32.mrf.mxu0
    %v966 = vadd.f32 0.0, %v965
    %v967 = vpop.f32.mrf.mxu0
    %968 = vdwg.mxu0
    %969 = vmatpush.bf16.msra.mxu0 %v627
    %970 = vmatpush.bf16.msra.mxu0 %v625
    %971 = vmatpush.bf16.msra.mxu0 %v623
    %972 = vmatpush.bf16.msra.mxu0 %v621
    %973 = vmatpush.bf16.msra.mxu0 %v619
    %974 = vmatpush.bf16.msra.mxu0 %v617
    %975 = vmatpush.bf16.msra.mxu0 %v615
    %976 = vmatpush.bf16.msra.mxu0 %v613
    %977 = vmatmul.bf16.gmra.mxu0 %v77
    %v978 = vpop.f32.mrf.mxu0
    %v979 = vadd.f32 %v966, %v978
    %v980 = vpop.f32.mrf.mxu0
    %981 = vdwg.mxu0
    %982 = vmatpush.bf16.msra.mxu0 %v643
    %983 = vmatpush.bf16.msra.mxu0 %v641
    %984 = vmatpush.bf16.msra.mxu0 %v639
    %985 = vmatpush.bf16.msra.mxu0 %v637
    %986 = vmatpush.bf16.msra.mxu0 %v635
    %987 = vmatpush.bf16.msra.mxu0 %v633
    %988 = vmatpush.bf16.msra.mxu0 %v631
    %989 = vmatpush.bf16.msra.mxu0 %v629
    %990 = vmatmul.bf16.gmra.mxu0 %v78
    %v991 = vpop.f32.mrf.mxu0
    %v992 = vadd.f32 %v979, %v991
    %v993 = vpop.f32.mrf.mxu0
    %994 = vdwg.mxu0
    %995 = vmatpush.bf16.msra.mxu0 %v659
    %996 = vmatpush.bf16.msra.mxu0 %v657
    %997 = vmatpush.bf16.msra.mxu0 %v655
    %998 = vmatpush.bf16.msra.mxu0 %v653
    %999 = vmatpush.bf16.msra.mxu0 %v651
    %1000 = vmatpush.bf16.msra.mxu0 %v649
    %1001 = vmatpush.bf16.msra.mxu0 %v647
    %1002 = vmatpush.bf16.msra.mxu0 %v645
    %1003 = vmatmul.bf16.gmra.mxu0 %v79
    %v1004 = vpop.f32.mrf.mxu0
    %v1005 = vadd.f32 %v992, %v1004
    %v1006 = vpop.f32.mrf.mxu0
    %1007 = vdwg.mxu0
    %1008 = vmatpush.bf16.msra.mxu0 %v675
    %1009 = vmatpush.bf16.msra.mxu0 %v673
    %1010 = vmatpush.bf16.msra.mxu0 %v671
    %1011 = vmatpush.bf16.msra.mxu0 %v669
    %1012 = vmatpush.bf16.msra.mxu0 %v667
    %1013 = vmatpush.bf16.msra.mxu0 %v665
    %1014 = vmatpush.bf16.msra.mxu0 %v663
    %1015 = vmatpush.bf16.msra.mxu0 %v661
    %1016 = vmatmul.bf16.gmra.mxu0 %v80
    %v1017 = vpop.f32.mrf.mxu0
    %v1018 = vadd.f32 %v1005, %v1017
    %v1019 = vpop.f32.mrf.mxu0
    %1020 = vdwg.mxu0
    %1021 = vmatpush.bf16.msra.mxu0 %v691
    %1022 = vmatpush.bf16.msra.mxu0 %v689
    %1023 = vmatpush.bf16.msra.mxu0 %v687
    %1024 = vmatpush.bf16.msra.mxu0 %v685
    %1025 = vmatpush.bf16.msra.mxu0 %v683
    %1026 = vmatpush.bf16.msra.mxu0 %v681
    %1027 = vmatpush.bf16.msra.mxu0 %v679
    %1028 = vmatpush.bf16.msra.mxu0 %v677
    %1029 = vmatmul.bf16.gmra.mxu0 %v81
    %v1030 = vpop.f32.mrf.mxu0
    %v1031 = vadd.f32 %v1018, %v1030
    %v1032 = vpop.f32.mrf.mxu0
    %1033 = vdwg.mxu0
    %1034 = vmatpush.bf16.msra.mxu0 %v707
    %1035 = vmatpush.bf16.msra.mxu0 %v705
    %1036 = vmatpush.bf16.msra.mxu0 %v703
    %1037 = vmatpush.bf16.msra.mxu0 %v701
    %1038 = vmatpush.bf16.msra.mxu0 %v699
    %1039 = vmatpush.bf16.msra.mxu0 %v697
    %1040 = vmatpush.bf16.msra.mxu0 %v695
    %1041 = vmatpush.bf16.msra.mxu0 %v693
    %1042 = vmatmul.bf16.gmra.mxu0 %v82
    %v1043 = vpop.f32.mrf.mxu0
    %v1044 = vadd.f32 %v1031, %v1043
    %v1045 = vpop.f32.mrf.mxu0
    %1046 = vdwg.mxu0
    %1047 = vmatpush.bf16.msra.mxu0 %v723
    %1048 = vmatpush.bf16.msra.mxu0 %v721
    %1049 = vmatpush.bf16.msra.mxu0 %v719
    %1050 = vmatpush.bf16.msra.mxu0 %v717
    %1051 = vmatpush.bf16.msra.mxu0 %v715
    %1052 = vmatpush.bf16.msra.mxu0 %v713
    %1053 = vmatpush.bf16.msra.mxu0 %v711
    %1054 = vmatpush.bf16.msra.mxu0 %v709
    %1055 = vmatmul.bf16.gmra.mxu0 %v83
    %v1056 = vpop.f32.mrf.mxu0
    %v1057 = vadd.f32 %v1044, %v1056
    %v1058 = vpop.f32.mrf.mxu0
    %1059 = vdwg.mxu0
    %v1060 = vadd.f32 %v74, %v953
    %v1061 = vadd.f32 %v75, %v1057
    %1062 = vst [vmem:[#allocation2] sm:$0xff] %v1060
    %1063 = vst [vmem:[#allocation2 + $0x8] sm:$0xff] %v1061
    // Predicated region
    $region42: #{discreminator_forward.1} parent=1 // pred_check
      %p1064 = pneg %p60
    $region43: #{discreminator_forward.1} parent=1 // pred_check_branch
      %1066 = sbr.rel (%p1064) target = $region45
    $region44: #{discreminator_forward.1} parent=1 // pred_region
      %v1067 = vld [vmem:[#allocation2] sm:$0xff]
      %v1068 = vld [vmem:[#allocation2 + $0x8] sm:$0xff]
      %v1069 = vld [vmem:[%s2] sm:$0x3]
      %v1071 = vperm.slane %v1069, 0
      %v1072 = vperm.slane %v1069, 1
      %v1075 = vadd.f32 %v1067, %v1071
      %v1076 = vadd.f32 %v1068, %v1072
      %vm1077 = vcmp.ge.f32.partialorder %v1075, 0.0
      %vm1078 = vcmp.ge.f32.partialorder %v1076, 0.0
      %v1079 = vmul.f32 %v1075, 0.2
      %v1080 = vmul.f32 %v1076, 0.2
      %v1081 = vsel %vm1077, %v1075, %v1079
      %v1082 = vsel %vm1078, %v1076, %v1080
      %v1083 = vpack.c.bf16 %v1081, %v1081
      %v1084 = vpack.c.bf16 %v1082, %v1082
      %v1085 = vld [vmem:[#allocation6] sm:$0xff]
      %v1086 = vld [vmem:[#allocation6 + $0x8] sm:$0xff]
      %v1087 = vld [vmem:[#allocation6 + $0x10] sm:$0xff]
      %v1088 = vld [vmem:[#allocation6 + $0x18] sm:$0xff]
      %v1089 = vld [vmem:[#allocation6 + $0x20] sm:$0xff]
      %v1090 = vld [vmem:[#allocation6 + $0x28] sm:$0xff]
      %v1091 = vld [vmem:[#allocation6 + $0x30] sm:$0xff]
      %v1092 = vld [vmem:[#allocation6 + $0x38] sm:$0xff]
      %v1093 = vld [vmem:[#allocation6 + $0x40] sm:$0xff]
      %v1094 = vld [vmem:[#allocation6 + $0x48] sm:$0xff]
      %v1095 = vld [vmem:[#allocation6 + $0x50] sm:$0xff]
      %v1096 = vld [vmem:[#allocation6 + $0x58] sm:$0xff]
      %v1097 = vld [vmem:[#allocation6 + $0x60] sm:$0xff]
      %v1098 = vld [vmem:[#allocation6 + $0x68] sm:$0xff]
      %v1099 = vld [vmem:[#allocation6 + $0x70] sm:$0xff]
      %v1100 = vld [vmem:[#allocation6 + $0x78] sm:$0xff]
      %v1101 = vld [vmem:[#allocation6 + $0x80] sm:$0xff]
      %v1102 = vld [vmem:[#allocation6 + $0x88] sm:$0xff]
      %v1103 = vld [vmem:[#allocation6 + $0x90] sm:$0xff]
      %v1104 = vld [vmem:[#allocation6 + $0x98] sm:$0xff]
      %v1105 = vld [vmem:[#allocation6 + $0xa0] sm:$0xff]
      %v1106 = vld [vmem:[#allocation6 + $0xa8] sm:$0xff]
      %v1107 = vld [vmem:[#allocation6 + $0xb0] sm:$0xff]
      %v1108 = vld [vmem:[#allocation6 + $0xb8] sm:$0xff]
      %v1109 = vld [vmem:[#allocation6 + $0xc0] sm:$0xff]
      %v1110 = vld [vmem:[#allocation6 + $0xc8] sm:$0xff]
      %v1111 = vld [vmem:[#allocation6 + $0xd0] sm:$0xff]
      %v1112 = vld [vmem:[#allocation6 + $0xd8] sm:$0xff]
      %v1113 = vld [vmem:[#allocation6 + $0xe0] sm:$0xff]
      %v1114 = vld [vmem:[#allocation6 + $0xe8] sm:$0xff]
      %v1115 = vld [vmem:[#allocation6 + $0xf0] sm:$0xff]
      %v1116 = vld [vmem:[#allocation6 + $0xf8] sm:$0xff]
      %v1117 = vld [vmem:[%s4] sm:$0x3]
      %v1119 = vperm.slane %v1117, 0
      %v1120 = vperm.slane %v1117, 1
      %v1155 = vunpack.c.l.b16 %v1085
      %v1156 = vunpack.c.h.b16 %v1085
      %v1157 = vunpack.c.l.b16 %v1086
      %v1158 = vunpack.c.h.b16 %v1086
      %v1159 = vunpack.c.l.b16 %v1087
      %v1160 = vunpack.c.h.b16 %v1087
      %v1161 = vunpack.c.l.b16 %v1088
      %v1162 = vunpack.c.h.b16 %v1088
      %v1163 = vunpack.c.l.b16 %v1089
      %v1164 = vunpack.c.h.b16 %v1089
      %v1165 = vunpack.c.l.b16 %v1090
      %v1166 = vunpack.c.h.b16 %v1090
      %v1167 = vunpack.c.l.b16 %v1091
      %v1168 = vunpack.c.h.b16 %v1091
      %v1169 = vunpack.c.l.b16 %v1092
      %v1170 = vunpack.c.h.b16 %v1092
      %v1171 = vunpack.c.l.b16 %v1093
      %v1172 = vunpack.c.h.b16 %v1093
      %v1173 = vunpack.c.l.b16 %v1094
      %v1174 = vunpack.c.h.b16 %v1094
      %v1175 = vunpack.c.l.b16 %v1095
      %v1176 = vunpack.c.h.b16 %v1095
      %v1177 = vunpack.c.l.b16 %v1096
      %v1178 = vunpack.c.h.b16 %v1096
      %v1179 = vunpack.c.l.b16 %v1097
      %v1180 = vunpack.c.h.b16 %v1097
      %v1181 = vunpack.c.l.b16 %v1098
      %v1182 = vunpack.c.h.b16 %v1098
      %v1183 = vunpack.c.l.b16 %v1099
      %v1184 = vunpack.c.h.b16 %v1099
      %v1185 = vunpack.c.l.b16 %v1100
      %v1186 = vunpack.c.h.b16 %v1100
      %v1187 = vunpack.c.l.b16 %v1101
      %v1188 = vunpack.c.h.b16 %v1101
      %v1189 = vunpack.c.l.b16 %v1102
      %v1190 = vunpack.c.h.b16 %v1102
      %v1191 = vunpack.c.l.b16 %v1103
      %v1192 = vunpack.c.h.b16 %v1103
      %v1193 = vunpack.c.l.b16 %v1104
      %v1194 = vunpack.c.h.b16 %v1104
      %v1195 = vunpack.c.l.b16 %v1105
      %v1196 = vunpack.c.h.b16 %v1105
      %v1197 = vunpack.c.l.b16 %v1106
      %v1198 = vunpack.c.h.b16 %v1106
      %v1199 = vunpack.c.l.b16 %v1107
      %v1200 = vunpack.c.h.b16 %v1107
      %v1201 = vunpack.c.l.b16 %v1108
      %v1202 = vunpack.c.h.b16 %v1108
      %v1203 = vunpack.c.l.b16 %v1109
      %v1204 = vunpack.c.h.b16 %v1109
      %v1205 = vunpack.c.l.b16 %v1110
      %v1206 = vunpack.c.h.b16 %v1110
      %v1207 = vunpack.c.l.b16 %v1111
      %v1208 = vunpack.c.h.b16 %v1111
      %v1209 = vunpack.c.l.b16 %v1112
      %v1210 = vunpack.c.h.b16 %v1112
      %v1211 = vunpack.c.l.b16 %v1113
      %v1212 = vunpack.c.h.b16 %v1113
      %v1213 = vunpack.c.l.b16 %v1114
      %v1214 = vunpack.c.h.b16 %v1114
      %v1215 = vunpack.c.l.b16 %v1115
      %v1216 = vunpack.c.h.b16 %v1115
      %v1217 = vunpack.c.l.b16 %v1116
      %v1218 = vunpack.c.h.b16 %v1116
      %v1219 = vpack.c.b16 %v1157, %v1155
      %v1220 = vpack.c.b16 %v1158, %v1156
      %v1221 = vpack.c.b16 %v1161, %v1159
      %v1222 = vpack.c.b16 %v1162, %v1160
      %v1223 = vpack.c.b16 %v1165, %v1163
      %v1224 = vpack.c.b16 %v1166, %v1164
      %v1225 = vpack.c.b16 %v1169, %v1167
      %v1226 = vpack.c.b16 %v1170, %v1168
      %v1227 = vpack.c.b16 %v1173, %v1171
      %v1228 = vpack.c.b16 %v1174, %v1172
      %v1229 = vpack.c.b16 %v1177, %v1175
      %v1230 = vpack.c.b16 %v1178, %v1176
      %v1231 = vpack.c.b16 %v1181, %v1179
      %v1232 = vpack.c.b16 %v1182, %v1180
      %v1233 = vpack.c.b16 %v1185, %v1183
      %v1234 = vpack.c.b16 %v1186, %v1184
      %v1235 = vpack.c.b16 %v1189, %v1187
      %v1236 = vpack.c.b16 %v1190, %v1188
      %v1237 = vpack.c.b16 %v1193, %v1191
      %v1238 = vpack.c.b16 %v1194, %v1192
      %v1239 = vpack.c.b16 %v1197, %v1195
      %v1240 = vpack.c.b16 %v1198, %v1196
      %v1241 = vpack.c.b16 %v1201, %v1199
      %v1242 = vpack.c.b16 %v1202, %v1200
      %v1243 = vpack.c.b16 %v1205, %v1203
      %v1244 = vpack.c.b16 %v1206, %v1204
      %v1245 = vpack.c.b16 %v1209, %v1207
      %v1246 = vpack.c.b16 %v1210, %v1208
      %v1247 = vpack.c.b16 %v1213, %v1211
      %v1248 = vpack.c.b16 %v1214, %v1212
      %v1249 = vpack.c.b16 %v1217, %v1215
      %v1250 = vpack.c.b16 %v1218, %v1216
      %1283 = vmatpush.bf16.msra.mxu0 %v1233
      %1284 = vmatpush.bf16.msra.mxu0 %v1231
      %1285 = vmatpush.bf16.msra.mxu0 %v1229
      %1286 = vmatpush.bf16.msra.mxu0 %v1227
      %1287 = vmatpush.bf16.msra.mxu0 %v1225
      %1288 = vmatpush.bf16.msra.mxu0 %v1223
      %1289 = vmatpush.bf16.msra.mxu0 %v1221
      %1290 = vmatpush.bf16.msra.mxu0 %v1219
      %1291 = vmatmul.bf16.gmra.mxu0 %v1083
      %v1292 = vpop.f32.mrf.mxu0
      %v1293 = vadd.f32 %v1119, %v1292
      %v1294 = vpop.f32.mrf.mxu0
      %1295 = vdwg.mxu0
      %1296 = vmatpush.bf16.msra.mxu0 %v1249
      %1297 = vmatpush.bf16.msra.mxu0 %v1247
      %1298 = vmatpush.bf16.msra.mxu0 %v1245
      %1299 = vmatpush.bf16.msra.mxu0 %v1243
      %1300 = vmatpush.bf16.msra.mxu0 %v1241
      %1301 = vmatpush.bf16.msra.mxu0 %v1239
      %1302 = vmatpush.bf16.msra.mxu0 %v1237
      %1303 = vmatpush.bf16.msra.mxu0 %v1235
      %1304 = vmatmul.bf16.gmra.mxu0 %v1084
      %v1305 = vpop.f32.mrf.mxu0
      %v1306 = vadd.f32 %v1293, %v1305
      %v1307 = vpop.f32.mrf.mxu0
      %1308 = vdwg.mxu0
      %1309 = vmatpush.bf16.msra.mxu0 %v1234
      %1310 = vmatpush.bf16.msra.mxu0 %v1232
      %1311 = vmatpush.bf16.msra.mxu0 %v1230
      %1312 = vmatpush.bf16.msra.mxu0 %v1228
      %1313 = vmatpush.bf16.msra.mxu0 %v1226
      %1314 = vmatpush.bf16.msra.mxu0 %v1224
      %1315 = vmatpush.bf16.msra.mxu0 %v1222
      %1316 = vmatpush.bf16.msra.mxu0 %v1220
      %1317 = vmatmul.bf16.gmra.mxu0 %v1083
      %v1318 = vpop.f32.mrf.mxu0
      %v1319 = vadd.f32 %v1120, %v1318
      %v1320 = vpop.f32.mrf.mxu0
      %1321 = vdwg.mxu0
      %1322 = vmatpush.bf16.msra.mxu0 %v1250
      %1323 = vmatpush.bf16.msra.mxu0 %v1248
      %1324 = vmatpush.bf16.msra.mxu0 %v1246
      %1325 = vmatpush.bf16.msra.mxu0 %v1244
      %1326 = vmatpush.bf16.msra.mxu0 %v1242
      %1327 = vmatpush.bf16.msra.mxu0 %v1240
      %1328 = vmatpush.bf16.msra.mxu0 %v1238
      %1329 = vmatpush.bf16.msra.mxu0 %v1236
      %1330 = vmatmul.bf16.gmra.mxu0 %v1084
      %v1331 = vpop.f32.mrf.mxu0
      %v1332 = vadd.f32 %v1319, %v1331
      %v1333 = vpop.f32.mrf.mxu0
      %1334 = vdwg.mxu0
      %vm1335 = vcmp.ge.f32.partialorder %v1306, 0.0
      %vm1336 = vcmp.ge.f32.partialorder %v1332, 0.0
      %v1337 = vmul.f32 %v1306, 0.2
      %v1338 = vmul.f32 %v1332, 0.2
      %v1339 = vsel %vm1335, %v1306, %v1337
      %v1340 = vsel %vm1336, %v1332, %v1338
      %v1341 = vld [vmem:[%s5] sm:$0xff]
      %v1342 = vld [vmem:[%s5 + $0x8] sm:$0xff]
      %v1343 = vpack.c.bf16 %v1339, %v1339
      %v1344 = vpack.c.bf16 %v1340, %v1340
      %v1347 = vunpack.c.l.b16 %v1341
      %v1348 = vunpack.c.h.b16 %v1341
      %v1349 = vunpack.c.l.b16 %v1342
      %v1350 = vunpack.c.h.b16 %v1342
      %v1351 = vpack.c.b16 %v1349, %v1347
      %v1352 = vpack.c.b16 %v1350, %v1348
      %1355 = vmatpush.bf16.xpose.msra.mxu0 0
      %1356 = vmatpush.bf16.xpose.msra.mxu0 0
      %1357 = vmatpush.bf16.xpose.msra.mxu0 0
      %1358 = vmatpush.bf16.xpose.msra.mxu0 0
      %1359 = vmatpush.bf16.xpose.msra.mxu0 0
      %1360 = vmatpush.bf16.xpose.msra.mxu0 0
      %1361 = vmatpush.bf16.xpose.msra.mxu0 0
      %1362 = vmatpush.bf16.xpose.msra.mxu0 %v1343
      %1363 = vmatmul.bf16.gmra.mxu0 %v1351
      %v1364 = vpop.f32.mrf.mxu0
      %v1365 = vadd.f32 0.0, %v1364
      %v1366 = vpop.f32.mrf.mxu0
      %1367 = vdwg.mxu0
      %1368 = vmatpush.bf16.xpose.msra.mxu0 0
      %1369 = vmatpush.bf16.xpose.msra.mxu0 0
      %1370 = vmatpush.bf16.xpose.msra.mxu0 0
      %1371 = vmatpush.bf16.xpose.msra.mxu0 0
      %1372 = vmatpush.bf16.xpose.msra.mxu0 0
      %1373 = vmatpush.bf16.xpose.msra.mxu0 0
      %1374 = vmatpush.bf16.xpose.msra.mxu0 0
      %1375 = vmatpush.bf16.xpose.msra.mxu0 %v1344
      %1376 = vmatmul.bf16.gmra.mxu0 %v1352
      %v1377 = vpop.f32.mrf.mxu0
      %v1378 = vadd.f32 %v1365, %v1377
      %v1379 = vpop.f32.mrf.mxu0
      %1380 = vdwg.mxu0
      %s1381 = sld [smem:[#allocation3]]
      %v1382 = vstv %s1381
      %v1383 = vadd.f32 %v1378, %v1382
      %v1384 = vxor.u32 %v1383, 2147483648
      %v1385 = vmul.f32 %v1384, 1.442695
      %v1386 = vpow.pop %v1385
      %v1387 = vadd.f32 %v1386, 1.0
      %v1388 = vrcp.pop %v1387
      %v1389 = vmul.f32 %v1387, %v1388
      %v1390 = vsub.f32 1.0, %v1389
      %v1391 = vmul.f32 %v1388, %v1390
      %v1392 = vadd.f32 %v1388, %v1391
      %vm1393 = vweird.f32 %v1387
      %vm1394 = vweird.f32 %v1388
      %vm1395 = vmor %vm1393, %vm1394
      %v1396 = vsel %vm1395, %v1388, %v1392
      %v1397 = vand.u32 2147483647, %v1387
      %vm1398 = vcmp.eq.f32.partialorder %v1397, 8.507059e+37
      %v1399 = vand.u32 %v1387, 2147483648
      %v1400 = vor.u32 1.1754944e-38, %v1399
      %v1401 = vsel %vm1398, %v1400, %v1396
      %v1402 = vmul.f32 1.0, %v1401
      %vm1403 = vcmask 57344
      %1404 = vst.msk [vmem:[%s7] sm:$0x1] %vm1403, %v1402
    $region45: #{discreminator_forward.1} parent=1 // pred_fallthru
      _
    // Predicated region
    $region46: #{discreminator_forward.1} parent=1 // pred_check
      _
    $region47: #{discreminator_forward.1} parent=1 // pred_check_branch
      %1406 = sbr.rel (0) target = $region49
    $region48: #{discreminator_forward.1} parent=1 // pred_region
      _
    $region49: #{discreminator_forward.1} parent=1 // pred_fallthru
      _
    // Predicated region
    $region50: #{discreminator_forward.1} parent=1 // pred_check
      _
    $region51: #{discreminator_forward.1} parent=1 // pred_check_branch
      %1408 = sbr.rel (0) target = $region53
    $region52: #{discreminator_forward.1} parent=1 // pred_region
      _
    $region53: #{discreminator_forward.1} parent=1 // pred_fallthru
      _
    %1409 = vsyncpa [#allocation5], 1
    %1410 = vsyncpa [#allocation7], 1

</llo_original>
